<compile_context>
chip_gen: v5e
topology: v5e:2x2
jax: 0.10.0
libtpu: 0.0.40
codegen_flags: <defaults>
</compile_context>

<pallas_src>
import functools

import jax
import jax.numpy as jnp
from jax.experimental import pallas as pl
from jax.experimental.pallas import tpu as pltpu


def _custom_loss_kernel(packed_ref, out_ref, acc_ref, *, inv_n):
    """packed_ref: (8, block_n) f32 tile.
       rows: 0=lower 1=upper 2=target 3=prev_pci 4=delta_time 5=pv 6,7=pad
       out_ref: (1, 1) f32 in SMEM.  acc_ref: (1, block_n) f32 VMEM scratch."""
    i = pl.program_id(0)

    @pl.when(i == 0)
    def _init():
        acc_ref[...] = jnp.zeros_like(acc_ref)

    blk = packed_ref[...]                       # (8, block_n) f32, one slab
    lower = blk[0:1, :]
    upper = blk[1:2, :]
    tgt = blk[2:3, :]
    prev = blk[3:4, :]
    dt = blk[4:5, :]
    pv = blk[5:6, :]

    # coverage_violation = relu(target - upper) + relu(lower - target)
    cov = jnp.maximum(tgt - upper, 0.0) + jnp.maximum(lower - tgt, 0.0)
    # valid violation = clamp(lower - upper, min=0)
    valid = jnp.maximum(lower - upper, 0.0)
    # direction penalty (vectorized form of the per-sample python loop)
    center = (lower + upper) * 0.5
    diff = jnp.where(pv == 0.0, center - prev, prev - center)
    dir_t = jnp.where(dt != 0.0, jnp.maximum(diff, 0.0), 0.0)

    # Running per-lane partial sums (pure VPU adds per step; reduce once at end).
    # Padded lanes are all-zero -> contribute exactly 0.
    acc_ref[...] += 0.1 * cov + 10.0 * valid + 0.5 * dir_t

    @pl.when(i == pl.num_programs(0) - 1)
    def _finalize():
        out_ref[0, 0] = jnp.sum(acc_ref[...]) * inv_n


def custom_loss(pred, target, prev_pci, delta_time, pv_values, *, block_n=4096):
    """pred: (N, 2) [lower, upper]; others: (N,) or (N, 1). Returns scalar loss."""
    pred = jnp.asarray(pred, jnp.float32)
    n = pred.shape[0]
    flat = lambda a: jnp.asarray(a, jnp.float32).reshape(n)

    n_pad = ((n + block_n - 1) // block_n) * block_n
    num_blocks = n_pad // block_n

    zeros = jnp.zeros((n,), jnp.float32)
    # Lane-dense repack: (8, N) rows, then zero-pad N up to n_pad.
    packed = jnp.stack(
        [pred[:, 0], pred[:, 1], flat(target), flat(prev_pci),
         flat(delta_time), flat(pv_values),
         zeros, zeros],                           # pad rows -> 8 sublanes
        axis=0)
    packed = jnp.pad(packed, ((0, 0), (0, n_pad - n)))   # (8, n_pad)

    kernel = functools.partial(_custom_loss_kernel, inv_n=1.0 / float(n))

    grid_spec = pltpu.PrefetchScalarGridSpec(
        num_scalar_prefetch=0,
        grid=(num_blocks,),
        in_specs=[pl.BlockSpec((8, block_n), lambda i: (0, i))],
        out_specs=pl.BlockSpec(memory_space=pltpu.MemorySpace.SMEM),
        scratch_shapes=[pltpu.VMEM((1, block_n), jnp.float32)],
    )

    out = pl.pallas_call(
        kernel,
        out_shape=jax.ShapeDtypeStruct((1, 1), jnp.float32),
        grid_spec=grid_spec,
        compiler_params=pltpu.CompilerParams(
            dimension_semantics=("arbitrary",),     # reduction axis
            vmem_limit_bytes=32 * 1024 * 1024),
        cost_estimate=pl.CostEstimate(
            flops=14 * n_pad,
            transcendentals=0,
            bytes_accessed=8 * n_pad * 4 + 4),
    )(packed)
    return out[0, 0]


def _reference_loss(pred, target, prev_pci, delta_time, pv_values):
    # Pure-JAX reference mirroring the PyTorch module.
    n = pred.shape[0]
    lower = pred[:, 0:1]
    upper = pred[:, 1:2]
    target = target.reshape(n, 1)
    coverage_penalty = jnp.mean(jax.nn.relu(target - upper)
                                + jax.nn.relu(lower - target))
    valid_penalty = jnp.mean(jnp.clip(lower - upper, min=0))
    center = (lower + upper) / 2
    prev = prev_pci.reshape(n, 1)
    dt = delta_time.reshape(n, 1)
    pv = pv_values.reshape(n, 1)
    dir_terms = jnp.where((pv == 0) & (dt != 0), jax.nn.relu(center - prev),
                          jnp.where((pv != 0) & (dt != 0),
                                    jax.nn.relu(prev - center), 0.0))
    direction_penalty = jnp.sum(dir_terms)
    return 0.1 * coverage_penalty + 10 * valid_penalty + 0.5 * direction_penalty / n


if __name__ == "__main__":
    key = jax.random.PRNGKey(0)
    k1, k2, k3, k4 = jax.random.split(key, 4)

    # Small deterministic test (N=8) exercising all branches of the python loop.
    N = 8
    pred = jax.random.normal(k1, (N, 2), jnp.float32)            # [lower, upper]
    target = jax.random.normal(k2, (N,), jnp.float32)
    prev_pci = jax.random.normal(k3, (N,), jnp.float32)
    delta_time = jnp.array([0.0, 1.0, 2.0, 0.0, 3.0, 1.5, 0.0, 2.5], jnp.float32)
    pv_values = jnp.array([0.0, 0.0, 1.0, 1.0, 0.0, 2.0, 0.0, 0.0], jnp.float32)

    out = custom_loss(pred, target, prev_pci, delta_time, pv_values)
    jax.block_until_ready(out)
    ref = _reference_loss(pred, target, prev_pci, delta_time, pv_values)
    assert jnp.allclose(out, ref, rtol=1e-5, atol=1e-5), (out, ref)

    # Multi-block test: exercises the pipelined grid, accumulation and padding.
    N2 = 5000
    kk = jax.random.split(k4, 5)
    pred2 = jax.random.normal(kk[0], (N2, 2), jnp.float32)
    target2 = jax.random.normal(kk[1], (N2,), jnp.float32)
    prev2 = jax.random.normal(kk[2], (N2,), jnp.float32)
    dt2 = jnp.where(jax.random.uniform(kk[3], (N2,)) < 0.3, 0.0,
                    jax.random.normal(kk[3], (N2,), jnp.float32))
    pv2 = jnp.where(jax.random.uniform(kk[4], (N2,)) < 0.5, 0.0, 1.0)
    pv2 = pv2.astype(jnp.float32)

    out2 = custom_loss(pred2, target2, prev2, dt2, pv2, block_n=1024)
    jax.block_until_ready(out2)
    ref2 = _reference_loss(pred2, target2, prev2, dt2, pv2)
    assert jnp.allclose(out2, ref2, rtol=1e-4, atol=1e-5), (out2, ref2)

    print("KERNEL_OK")
</pallas_src>

<mosaic_0001>
module attributes {stable_mosaic.version = 11 : i64} {
  func.func @_custom_loss_kernel(%arg0: i32, %arg1: memref<8x4096xf32, #tpu.memory_space<vmem>>, %arg2: memref<1x1xf32, #tpu.memory_space<smem>>, %arg3: memref<1x4096xf32, #tpu.memory_space<vmem>>) attributes {dimension_semantics = [#tpu.dimension_semantics<arbitrary>], iteration_bounds = array<i64: 1>, scalar_prefetch = 0 : i64, scratch_operands = 1 : i64, tpu.core_type = #tpu.core_type<tc>, window_params = [{transform_indices = @transform_0, window_bounds = array<i64: 8, 4096>}, {transform_indices = @transform_1, window_bounds = array<i64: 1, 1>}]} {
    %c0_i32 = arith.constant 0 : i32
    %0 = arith.cmpi eq, %arg0, %c0_i32 : i32
    %1 = arith.extui %0 : i1 to i32
    %c0_i32_0 = arith.constant 0 : i32
    %2 = arith.cmpi ne, %1, %c0_i32_0 : i32
    scf.if %2 {
      %cst_18 = arith.constant 0.000000e+00 : f32
      %48 = vector.broadcast %cst_18 : f32 to vector<1x4096xf32>
      %c0_19 = arith.constant 0 : index
      %c0_20 = arith.constant 0 : index
      %49 = vector.load %arg3[%c0_19, %c0_20] : memref<1x4096xf32, #tpu.memory_space<vmem>>, vector<1x4096xf32>
      tpu.vector_store %arg3[%c0_19, %c0_20], %48 {strides = array<i32>} : memref<1x4096xf32, #tpu.memory_space<vmem>>, vector<1x4096xf32>,
    } else {
    }
    %c0 = arith.constant 0 : index
    %c0_1 = arith.constant 0 : index
    %3 = vector.load %arg1[%c0, %c0_1] : memref<8x4096xf32, #tpu.memory_space<vmem>>, vector<8x4096xf32>
    %4 = vector.extract_strided_slice %3 {offsets = [0, 0], sizes = [1, 4096], strides = [1, 1]} : vector<8x4096xf32> to vector<1x4096xf32>
    %5 = vector.extract_strided_slice %3 {offsets = [1, 0], sizes = [1, 4096], strides = [1, 1]} : vector<8x4096xf32> to vector<1x4096xf32>
    %6 = vector.extract_strided_slice %3 {offsets = [2, 0], sizes = [1, 4096], strides = [1, 1]} : vector<8x4096xf32> to vector<1x4096xf32>
    %7 = vector.extract_strided_slice %3 {offsets = [3, 0], sizes = [1, 4096], strides = [1, 1]} : vector<8x4096xf32> to vector<1x4096xf32>
    %8 = vector.extract_strided_slice %3 {offsets = [4, 0], sizes = [1, 4096], strides = [1, 1]} : vector<8x4096xf32> to vector<1x4096xf32>
    %9 = vector.extract_strided_slice %3 {offsets = [5, 0], sizes = [1, 4096], strides = [1, 1]} : vector<8x4096xf32> to vector<1x4096xf32>
    %10 = arith.subf %6, %5 : vector<1x4096xf32>
    %cst = arith.constant 0.000000e+00 : f32
    %11 = vector.broadcast %cst : f32 to vector<1x4096xf32>
    %12 = arith.maximumf %10, %11 : vector<1x4096xf32>
    %13 = arith.subf %4, %6 : vector<1x4096xf32>
    %cst_2 = arith.constant 0.000000e+00 : f32
    %14 = vector.broadcast %cst_2 : f32 to vector<1x4096xf32>
    %15 = arith.maximumf %13, %14 : vector<1x4096xf32>
    %16 = arith.addf %12, %15 : vector<1x4096xf32>
    %17 = arith.subf %4, %5 : vector<1x4096xf32>
    %cst_3 = arith.constant 0.000000e+00 : f32
    %18 = vector.broadcast %cst_3 : f32 to vector<1x4096xf32>
    %19 = arith.maximumf %17, %18 : vector<1x4096xf32>
    %20 = arith.addf %4, %5 : vector<1x4096xf32>
    %cst_4 = arith.constant 5.000000e-01 : f32
    %21 = vector.broadcast %cst_4 : f32 to vector<1x4096xf32>
    %22 = arith.mulf %20, %21 : vector<1x4096xf32>
    %cst_5 = arith.constant 0.000000e+00 : f32
    %23 = vector.broadcast %cst_5 : f32 to vector<1x4096xf32>
    %24 = arith.cmpf oeq, %9, %23 : vector<1x4096xf32>
    %25 = arith.subf %22, %7 : vector<1x4096xf32>
    %26 = arith.subf %7, %22 : vector<1x4096xf32>
    %27 = arith.select %24, %25, %26 : vector<1x4096xi1>, vector<1x4096xf32>
    %cst_6 = arith.constant 0.000000e+00 : f32
    %28 = vector.broadcast %cst_6 : f32 to vector<1x4096xf32>
    %29 = arith.cmpf one, %8, %28 : vector<1x4096xf32>
    %cst_7 = arith.constant 0.000000e+00 : f32
    %30 = vector.broadcast %cst_7 : f32 to vector<1x4096xf32>
    %31 = arith.maximumf %27, %30 : vector<1x4096xf32>
    %cst_8 = arith.constant 0.000000e+00 : f32
    %32 = vector.broadcast %cst_8 : f32 to vector<1x4096xf32>
    %33 = arith.select %29, %31, %32 : vector<1x4096xi1>, vector<1x4096xf32>
    %c0_9 = arith.constant 0 : index
    %c0_10 = arith.constant 0 : index
    %34 = vector.load %arg3[%c0_9, %c0_10] : memref<1x4096xf32, #tpu.memory_space<vmem>>, vector<1x4096xf32>
    %cst_11 = arith.constant 1.000000e-01 : f32
    %35 = vector.broadcast %cst_11 : f32 to vector<1x4096xf32>
    %36 = arith.mulf %35, %16 : vector<1x4096xf32>
    %cst_12 = arith.constant 1.000000e+01 : f32
    %37 = vector.broadcast %cst_12 : f32 to vector<1x4096xf32>
    %38 = arith.mulf %37, %19 : vector<1x4096xf32>
    %39 = arith.addf %36, %38 : vector<1x4096xf32>
    %cst_13 = arith.constant 5.000000e-01 : f32
    %40 = vector.broadcast %cst_13 : f32 to vector<1x4096xf32>
    %41 = arith.mulf %40, %33 : vector<1x4096xf32>
    %42 = arith.addf %39, %41 : vector<1x4096xf32>
    %43 = arith.addf %34, %42 : vector<1x4096xf32>
    %c0_14 = arith.constant 0 : index
    %c0_15 = arith.constant 0 : index
    %44 = vector.load %arg3[%c0_14, %c0_15] : memref<1x4096xf32, #tpu.memory_space<vmem>>, vector<1x4096xf32>
    tpu.vector_store %arg3[%c0_14, %c0_15], %43 {strides = array<i32>} : memref<1x4096xf32, #tpu.memory_space<vmem>>, vector<1x4096xf32>,
    %c0_i32_16 = arith.constant 0 : i32
    %45 = arith.cmpi eq, %arg0, %c0_i32_16 : i32
    %46 = arith.extui %45 : i1 to i32
    %c0_i32_17 = arith.constant 0 : i32
    %47 = arith.cmpi ne, %46, %c0_i32_17 : i32
    scf.if %47 {
      %c0_18 = arith.constant 0 : index
      %c0_19 = arith.constant 0 : index
      %48 = vector.load %arg3[%c0_18, %c0_19] : memref<1x4096xf32, #tpu.memory_space<vmem>>, vector<1x4096xf32>
      %49 = vector.shape_cast %48 : vector<1x4096xf32> to vector<1x1x4096xf32>
      %cst_20 = arith.constant dense<0.000000e+00> : vector<1xf32>
      %50 = vector.multi_reduction <add>, %49, %cst_20 [1, 2] : vector<1x1x4096xf32> to vector<1xf32>
      %51 = vector.shape_cast %50 : vector<1xf32> to vector<1x1x1xf32>
      %52 = vector.extract %51[0, 0, 0] : f32 from vector<1x1x1xf32>
      %cst_21 = arith.constant 1.250000e-01 : f32
      %53 = arith.mulf %52, %cst_21 : f32
      %c0_22 = arith.constant 0 : index
      %c0_23 = arith.constant 0 : index
      %54 = memref.load %arg2[%c0_22, %c0_23] : memref<1x1xf32, #tpu.memory_space<smem>>
      memref.store %53, %arg2[%c0_22, %c0_23] : memref<1x1xf32, #tpu.memory_space<smem>>
    } else {
    }
    return
  }
  func.func @transform_0(%arg0: i32) -> (i32, i32) {
    %c0_i32 = arith.constant 0 : i32
    %c0_i32_0 = arith.constant 0 : i32
    return %c0_i32, %arg0 : i32, i32
  }
  func.func @transform_1(%arg0: i32) -> (i32, i32) {
    %c0_i32 = arith.constant 0 : i32
    %c0_i32_0 = arith.constant 0 : i32
    %c0_i32_1 = arith.constant 0 : i32
    return %c0_i32, %c0_i32_0 : i32, i32
  }
}

</mosaic_0001>

<llo_original>
// kernel: tpu_custom_call.1
$region0: #{tpu_custom_call.1}
  #allocation0 [shape = 'u32[]', space=smem, size = 0x4, offset = 0x4, fixed_abs, tag = 'smem constant byte address 0x4 - core index']
  #allocation1 [shape = 'u32[72,128]{1,0:T(1,128)}', space=vmem, size = 0x9000, scoped, tag = 'internal scratch']
  #allocation2 [shape = 'f32[1,4096]{1,0:T(1,128)}', space=vmem, size = 0x4000, scoped, tag = 'scratch operand']
  %s0 = inlined_call_operand.hbm [shape: f32[8,4096], index: 0, kind: input, shape index: {}]
  %s1 = inlined_call_operand.hbm [shape: f32[1,1], index: 1, kind: output, shape index: {}]
  %s2 = sld [smem:[#allocation0]]
  $region26: #{tpu_custom_call.1} parent=0
    _
  %s4 = ssub.s32 1, %s2
  %s5 = scalar_select 0, %s4, %s2
  $region1: #{tpu_custom_call.1} parent=0
    #allocation3 [shape = 'u8[131072]{0}', space=vmem, size = 0x20000, scoped, tag = 'input window, operand 0, single buffered']
    #allocation4 [shape = 's32[1]{0}', space=sflag, size = 0x4, scoped, tag = 'scoped memory for tpu_custom_call.1']
    #allocation5 [shape = 's32[1]{0}', space=sflag, size = 0x4, scoped, tag = 'scoped memory for tpu_custom_call.1']
    #allocation6 [shape = 'u8[512]{0}', space=smem, size = 0x200, scoped, tag = 'output window, operand 0, single buffered']
    %6 = vsyncpa [#allocation4], 0
    %7 = vsyncpa [#allocation5], 0
    // Predicated region
    $region2: #{tpu_custom_call.1} parent=1 // pred_check
      _
    $region3: #{tpu_custom_call.1} parent=1 // pred_check_branch
      %9 = sbr.rel (0) target = $region5
    $region4: #{tpu_custom_call.1} parent=1 // pred_region
      %11 = vsyncadd [#allocation4], 0
      %s13 = sshll.u32 %s0, 4
      %s14 = int_to_ptr.hbm [resolvable:$true] %s13
      %s15 = sshll.u32 [#allocation3], 4
      %s16 = int_to_ptr.vmem [resolvable:$true] %s15
      %18 = dma.hbm_to_vmem [thread:$0]  %s14, 4096, %s16, [#allocation4]
    $region5: #{tpu_custom_call.1} parent=1 // pred_fallthru
      _
    // Predicated region
    $region6: #{tpu_custom_call.1} parent=1 // pred_check
      _
    $region7: #{tpu_custom_call.1} parent=1 // pred_check_branch
      %20 = sbr.rel (0) target = $region9
    $region8: #{tpu_custom_call.1} parent=1 // pred_region
      %22 = dma.done [#allocation4], 4096
    $region9: #{tpu_custom_call.1} parent=1 // pred_fallthru
      _
    %p23 = scmp.eq.s32.totalorder 0, 0
    // Predicated region
    $region10: #{tpu_custom_call.1} parent=1 // pred_check
      %p24 = pneg %p23
    $region11: #{tpu_custom_call.1} parent=1 // pred_check_branch
      %26 = sbr.rel (%p24) target = $region13
    $region12: #{tpu_custom_call.1} parent=1 // pred_region
      %27 = vst [vmem:[#allocation2] sm:$0xff] 0.0
      %28 = vst [vmem:[#allocation2 + $0x8] sm:$0xff] 0.0
      %29 = vst [vmem:[#allocation2 + $0x10] sm:$0xff] 0.0
      %30 = vst [vmem:[#allocation2 + $0x18] sm:$0xff] 0.0
    $region13: #{tpu_custom_call.1} parent=1 // pred_fallthru
      _
    %v31 = vld [vmem:[#allocation3] sm:$0xff]
    %v32 = vld [vmem:[#allocation3 + $0x8] sm:$0xff]
    %v33 = vld [vmem:[#allocation3 + $0x10] sm:$0xff]
    %v34 = vld [vmem:[#allocation3 + $0x18] sm:$0xff]
    %v35 = vld [vmem:[#allocation3 + $0x20] sm:$0xff]
    %v36 = vld [vmem:[#allocation3 + $0x28] sm:$0xff]
    %v37 = vld [vmem:[#allocation3 + $0x30] sm:$0xff]
    %v38 = vld [vmem:[#allocation3 + $0x38] sm:$0xff]
    %v39 = vld [vmem:[#allocation3 + $0x40] sm:$0xff]
    %v40 = vld [vmem:[#allocation3 + $0x48] sm:$0xff]
    %v41 = vld [vmem:[#allocation3 + $0x50] sm:$0xff]
    %v42 = vld [vmem:[#allocation3 + $0x58] sm:$0xff]
    %v43 = vld [vmem:[#allocation3 + $0x60] sm:$0xff]
    %v44 = vld [vmem:[#allocation3 + $0x68] sm:$0xff]
    %v45 = vld [vmem:[#allocation3 + $0x70] sm:$0xff]
    %v46 = vld [vmem:[#allocation3 + $0x78] sm:$0xff]
    %v47 = vld [vmem:[#allocation3 + $0x80] sm:$0xff]
    %v48 = vld [vmem:[#allocation3 + $0x88] sm:$0xff]
    %v49 = vld [vmem:[#allocation3 + $0x90] sm:$0xff]
    %v50 = vld [vmem:[#allocation3 + $0x98] sm:$0xff]
    %v51 = vld [vmem:[#allocation3 + $0xa0] sm:$0xff]
    %v52 = vld [vmem:[#allocation3 + $0xa8] sm:$0xff]
    %v53 = vld [vmem:[#allocation3 + $0xb0] sm:$0xff]
    %v54 = vld [vmem:[#allocation3 + $0xb8] sm:$0xff]
    %v55 = vld [vmem:[#allocation3 + $0xc0] sm:$0xff]
    %v56 = vld [vmem:[#allocation3 + $0xc8] sm:$0xff]
    %v57 = vld [vmem:[#allocation3 + $0xd0] sm:$0xff]
    %v58 = vld [vmem:[#allocation3 + $0xd8] sm:$0xff]
    %v59 = vld [vmem:[#allocation3 + $0xe0] sm:$0xff]
    %v60 = vld [vmem:[#allocation3 + $0xe8] sm:$0xff]
    %v61 = vld [vmem:[#allocation3 + $0xf0] sm:$0xff]
    %v62 = vld [vmem:[#allocation3 + $0xf8] sm:$0xff]
    %v95 = vrot.slane %v31, 7
    %v96 = vrot.slane %v32, 7
    %v97 = vrot.slane %v33, 7
    %v98 = vrot.slane %v34, 7
    %v99 = vrot.slane %v35, 7
    %v100 = vrot.slane %v36, 7
    %v101 = vrot.slane %v37, 7
    %v102 = vrot.slane %v38, 7
    %v103 = vrot.slane %v39, 7
    %v104 = vrot.slane %v40, 7
    %v105 = vrot.slane %v41, 7
    %v106 = vrot.slane %v42, 7
    %v107 = vrot.slane %v43, 7
    %v108 = vrot.slane %v44, 7
    %v109 = vrot.slane %v45, 7
    %v110 = vrot.slane %v46, 7
    %v111 = vrot.slane %v47, 7
    %v112 = vrot.slane %v48, 7
    %v113 = vrot.slane %v49, 7
    %v114 = vrot.slane %v50, 7
    %v115 = vrot.slane %v51, 7
    %v116 = vrot.slane %v52, 7
    %v117 = vrot.slane %v53, 7
    %v118 = vrot.slane %v54, 7
    %v119 = vrot.slane %v55, 7
    %v120 = vrot.slane %v56, 7
    %v121 = vrot.slane %v57, 7
    %v122 = vrot.slane %v58, 7
    %v123 = vrot.slane %v59, 7
    %v124 = vrot.slane %v60, 7
    %v125 = vrot.slane %v61, 7
    %v126 = vrot.slane %v62, 7
    %v159 = vsub.f32 %v31, %v95
    %v160 = vsub.f32 %v32, %v96
    %v161 = vsub.f32 %v33, %v97
    %v162 = vsub.f32 %v34, %v98
    %v163 = vsub.f32 %v35, %v99
    %v164 = vsub.f32 %v36, %v100
    %v165 = vsub.f32 %v37, %v101
    %v166 = vsub.f32 %v38, %v102
    %v167 = vsub.f32 %v39, %v103
    %v168 = vsub.f32 %v40, %v104
    %v169 = vsub.f32 %v41, %v105
    %v170 = vsub.f32 %v42, %v106
    %v171 = vsub.f32 %v43, %v107
    %v172 = vsub.f32 %v44, %v108
    %v173 = vsub.f32 %v45, %v109
    %v174 = vsub.f32 %v46, %v110
    %v175 = vsub.f32 %v47, %v111
    %v176 = vsub.f32 %v48, %v112
    %v177 = vsub.f32 %v49, %v113
    %v178 = vsub.f32 %v50, %v114
    %v179 = vsub.f32 %v51, %v115
    %v180 = vsub.f32 %v52, %v116
    %v181 = vsub.f32 %v53, %v117
    %v182 = vsub.f32 %v54, %v118
    %v183 = vsub.f32 %v55, %v119
    %v184 = vsub.f32 %v56, %v120
    %v185 = vsub.f32 %v57, %v121
    %v186 = vsub.f32 %v58, %v122
    %v187 = vsub.f32 %v59, %v123
    %v188 = vsub.f32 %v60, %v124
    %v189 = vsub.f32 %v61, %v125
    %v190 = vsub.f32 %v62, %v126
    %v191 = vmax.f32 %v159, 0.0
    %v192 = vmax.f32 %v160, 0.0
    %v193 = vmax.f32 %v161, 0.0
    %v194 = vmax.f32 %v162, 0.0
    %v195 = vmax.f32 %v163, 0.0
    %v196 = vmax.f32 %v164, 0.0
    %v197 = vmax.f32 %v165, 0.0
    %v198 = vmax.f32 %v166, 0.0
    %v199 = vmax.f32 %v167, 0.0
    %v200 = vmax.f32 %v168, 0.0
    %v201 = vmax.f32 %v169, 0.0
    %v202 = vmax.f32 %v170, 0.0
    %v203 = vmax.f32 %v171, 0.0
    %v204 = vmax.f32 %v172, 0.0
    %v205 = vmax.f32 %v173, 0.0
    %v206 = vmax.f32 %v174, 0.0
    %v207 = vmax.f32 %v175, 0.0
    %v208 = vmax.f32 %v176, 0.0
    %v209 = vmax.f32 %v177, 0.0
    %v210 = vmax.f32 %v178, 0.0
    %v211 = vmax.f32 %v179, 0.0
    %v212 = vmax.f32 %v180, 0.0
    %v213 = vmax.f32 %v181, 0.0
    %v214 = vmax.f32 %v182, 0.0
    %v215 = vmax.f32 %v183, 0.0
    %v216 = vmax.f32 %v184, 0.0
    %v217 = vmax.f32 %v185, 0.0
    %v218 = vmax.f32 %v186, 0.0
    %v219 = vmax.f32 %v187, 0.0
    %v220 = vmax.f32 %v188, 0.0
    %v221 = vmax.f32 %v189, 0.0
    %v222 = vmax.f32 %v190, 0.0
    %v223 = vrot.slane %v31, 2
    %v224 = vrot.slane %v32, 2
    %v225 = vrot.slane %v33, 2
    %v226 = vrot.slane %v34, 2
    %v227 = vrot.slane %v35, 2
    %v228 = vrot.slane %v36, 2
    %v229 = vrot.slane %v37, 2
    %v230 = vrot.slane %v38, 2
    %v231 = vrot.slane %v39, 2
    %v232 = vrot.slane %v40, 2
    %v233 = vrot.slane %v41, 2
    %v234 = vrot.slane %v42, 2
    %v235 = vrot.slane %v43, 2
    %v236 = vrot.slane %v44, 2
    %v237 = vrot.slane %v45, 2
    %v238 = vrot.slane %v46, 2
    %v239 = vrot.slane %v47, 2
    %v240 = vrot.slane %v48, 2
    %v241 = vrot.slane %v49, 2
    %v242 = vrot.slane %v50, 2
    %v243 = vrot.slane %v51, 2
    %v244 = vrot.slane %v52, 2
    %v245 = vrot.slane %v53, 2
    %v246 = vrot.slane %v54, 2
    %v247 = vrot.slane %v55, 2
    %v248 = vrot.slane %v56, 2
    %v249 = vrot.slane %v57, 2
    %v250 = vrot.slane %v58, 2
    %v251 = vrot.slane %v59, 2
    %v252 = vrot.slane %v60, 2
    %v253 = vrot.slane %v61, 2
    %v254 = vrot.slane %v62, 2
    %v287 = vsub.f32 %v31, %v223
    %v288 = vsub.f32 %v32, %v224
    %v289 = vsub.f32 %v33, %v225
    %v290 = vsub.f32 %v34, %v226
    %v291 = vsub.f32 %v35, %v227
    %v292 = vsub.f32 %v36, %v228
    %v293 = vsub.f32 %v37, %v229
    %v294 = vsub.f32 %v38, %v230
    %v295 = vsub.f32 %v39, %v231
    %v296 = vsub.f32 %v40, %v232
    %v297 = vsub.f32 %v41, %v233
    %v298 = vsub.f32 %v42, %v234
    %v299 = vsub.f32 %v43, %v235
    %v300 = vsub.f32 %v44, %v236
    %v301 = vsub.f32 %v45, %v237
    %v302 = vsub.f32 %v46, %v238
    %v303 = vsub.f32 %v47, %v239
    %v304 = vsub.f32 %v48, %v240
    %v305 = vsub.f32 %v49, %v241
    %v306 = vsub.f32 %v50, %v242
    %v307 = vsub.f32 %v51, %v243
    %v308 = vsub.f32 %v52, %v244
    %v309 = vsub.f32 %v53, %v245
    %v310 = vsub.f32 %v54, %v246
    %v311 = vsub.f32 %v55, %v247
    %v312 = vsub.f32 %v56, %v248
    %v313 = vsub.f32 %v57, %v249
    %v314 = vsub.f32 %v58, %v250
    %v315 = vsub.f32 %v59, %v251
    %v316 = vsub.f32 %v60, %v252
    %v317 = vsub.f32 %v61, %v253
    %v318 = vsub.f32 %v62, %v254
    %v319 = vmax.f32 %v287, 0.0
    %v320 = vmax.f32 %v288, 0.0
    %v321 = vmax.f32 %v289, 0.0
    %v322 = vmax.f32 %v290, 0.0
    %v323 = vmax.f32 %v291, 0.0
    %v324 = vmax.f32 %v292, 0.0
    %v325 = vmax.f32 %v293, 0.0
    %v326 = vmax.f32 %v294, 0.0
    %v327 = vmax.f32 %v295, 0.0
    %v328 = vmax.f32 %v296, 0.0
    %v329 = vmax.f32 %v297, 0.0
    %v330 = vmax.f32 %v298, 0.0
    %v331 = vmax.f32 %v299, 0.0
    %v332 = vmax.f32 %v300, 0.0
    %v333 = vmax.f32 %v301, 0.0
    %v334 = vmax.f32 %v302, 0.0
    %v335 = vmax.f32 %v303, 0.0
    %v336 = vmax.f32 %v304, 0.0
    %v337 = vmax.f32 %v305, 0.0
    %v338 = vmax.f32 %v306, 0.0
    %v339 = vmax.f32 %v307, 0.0
    %v340 = vmax.f32 %v308, 0.0
    %v341 = vmax.f32 %v309, 0.0
    %v342 = vmax.f32 %v310, 0.0
    %v343 = vmax.f32 %v311, 0.0
    %v344 = vmax.f32 %v312, 0.0
    %v345 = vmax.f32 %v313, 0.0
    %v346 = vmax.f32 %v314, 0.0
    %v347 = vmax.f32 %v315, 0.0
    %v348 = vmax.f32 %v316, 0.0
    %v349 = vmax.f32 %v317, 0.0
    %v350 = vmax.f32 %v318, 0.0
    %v383 = vrot.slane %v319, 6
    %v384 = vrot.slane %v320, 6
    %v385 = vrot.slane %v321, 6
    %v386 = vrot.slane %v322, 6
    %v387 = vrot.slane %v323, 6
    %v388 = vrot.slane %v324, 6
    %v389 = vrot.slane %v325, 6
    %v390 = vrot.slane %v326, 6
    %v391 = vrot.slane %v327, 6
    %v392 = vrot.slane %v328, 6
    %v393 = vrot.slane %v329, 6
    %v394 = vrot.slane %v330, 6
    %v395 = vrot.slane %v331, 6
    %v396 = vrot.slane %v332, 6
    %v397 = vrot.slane %v333, 6
    %v398 = vrot.slane %v334, 6
    %v399 = vrot.slane %v335, 6
    %v400 = vrot.slane %v336, 6
    %v401 = vrot.slane %v337, 6
    %v402 = vrot.slane %v338, 6
    %v403 = vrot.slane %v339, 6
    %v404 = vrot.slane %v340, 6
    %v405 = vrot.slane %v341, 6
    %v406 = vrot.slane %v342, 6
    %v407 = vrot.slane %v343, 6
    %v408 = vrot.slane %v344, 6
    %v409 = vrot.slane %v345, 6
    %v410 = vrot.slane %v346, 6
    %v411 = vrot.slane %v347, 6
    %v412 = vrot.slane %v348, 6
    %v413 = vrot.slane %v349, 6
    %v414 = vrot.slane %v350, 6
    %v447 = vadd.f32 %v191, %v383
    %v448 = vadd.f32 %v192, %v384
    %v449 = vadd.f32 %v193, %v385
    %v450 = vadd.f32 %v194, %v386
    %v451 = vadd.f32 %v195, %v387
    %v452 = vadd.f32 %v196, %v388
    %v453 = vadd.f32 %v197, %v389
    %v454 = vadd.f32 %v198, %v390
    %v455 = vadd.f32 %v199, %v391
    %v456 = vadd.f32 %v200, %v392
    %v457 = vadd.f32 %v201, %v393
    %v458 = vadd.f32 %v202, %v394
    %v459 = vadd.f32 %v203, %v395
    %v460 = vadd.f32 %v204, %v396
    %v461 = vadd.f32 %v205, %v397
    %v462 = vadd.f32 %v206, %v398
    %v463 = vadd.f32 %v207, %v399
    %v464 = vadd.f32 %v208, %v400
    %v465 = vadd.f32 %v209, %v401
    %v466 = vadd.f32 %v210, %v402
    %v467 = vadd.f32 %v211, %v403
    %v468 = vadd.f32 %v212, %v404
    %v469 = vadd.f32 %v213, %v405
    %v470 = vadd.f32 %v214, %v406
    %v471 = vadd.f32 %v215, %v407
    %v472 = vadd.f32 %v216, %v408
    %v473 = vadd.f32 %v217, %v409
    %v474 = vadd.f32 %v218, %v410
    %v475 = vadd.f32 %v219, %v411
    %v476 = vadd.f32 %v220, %v412
    %v477 = vadd.f32 %v221, %v413
    %v478 = vadd.f32 %v222, %v414
    %v479 = vrot.slane %v31, 1
    %v480 = vrot.slane %v32, 1
    %v481 = vrot.slane %v33, 1
    %v482 = vrot.slane %v34, 1
    %v483 = vrot.slane %v35, 1
    %v484 = vrot.slane %v36, 1
    %v485 = vrot.slane %v37, 1
    %v486 = vrot.slane %v38, 1
    %v487 = vrot.slane %v39, 1
    %v488 = vrot.slane %v40, 1
    %v489 = vrot.slane %v41, 1
    %v490 = vrot.slane %v42, 1
    %v491 = vrot.slane %v43, 1
    %v492 = vrot.slane %v44, 1
    %v493 = vrot.slane %v45, 1
    %v494 = vrot.slane %v46, 1
    %v495 = vrot.slane %v47, 1
    %v496 = vrot.slane %v48, 1
    %v497 = vrot.slane %v49, 1
    %v498 = vrot.slane %v50, 1
    %v499 = vrot.slane %v51, 1
    %v500 = vrot.slane %v52, 1
    %v501 = vrot.slane %v53, 1
    %v502 = vrot.slane %v54, 1
    %v503 = vrot.slane %v55, 1
    %v504 = vrot.slane %v56, 1
    %v505 = vrot.slane %v57, 1
    %v506 = vrot.slane %v58, 1
    %v507 = vrot.slane %v59, 1
    %v508 = vrot.slane %v60, 1
    %v509 = vrot.slane %v61, 1
    %v510 = vrot.slane %v62, 1
    %v543 = vsub.f32 %v31, %v479
    %v544 = vsub.f32 %v32, %v480
    %v545 = vsub.f32 %v33, %v481
    %v546 = vsub.f32 %v34, %v482
    %v547 = vsub.f32 %v35, %v483
    %v548 = vsub.f32 %v36, %v484
    %v549 = vsub.f32 %v37, %v485
    %v550 = vsub.f32 %v38, %v486
    %v551 = vsub.f32 %v39, %v487
    %v552 = vsub.f32 %v40, %v488
    %v553 = vsub.f32 %v41, %v489
    %v554 = vsub.f32 %v42, %v490
    %v555 = vsub.f32 %v43, %v491
    %v556 = vsub.f32 %v44, %v492
    %v557 = vsub.f32 %v45, %v493
    %v558 = vsub.f32 %v46, %v494
    %v559 = vsub.f32 %v47, %v495
    %v560 = vsub.f32 %v48, %v496
    %v561 = vsub.f32 %v49, %v497
    %v562 = vsub.f32 %v50, %v498
    %v563 = vsub.f32 %v51, %v499
    %v564 = vsub.f32 %v52, %v500
    %v565 = vsub.f32 %v53, %v501
    %v566 = vsub.f32 %v54, %v502
    %v567 = vsub.f32 %v55, %v503
    %v568 = vsub.f32 %v56, %v504
    %v569 = vsub.f32 %v57, %v505
    %v570 = vsub.f32 %v58, %v506
    %v571 = vsub.f32 %v59, %v507
    %v572 = vsub.f32 %v60, %v508
    %v573 = vsub.f32 %v61, %v509
    %v574 = vsub.f32 %v62, %v510
    %v575 = vmax.f32 %v543, 0.0
    %v576 = vmax.f32 %v544, 0.0
    %v577 = vmax.f32 %v545, 0.0
    %v578 = vmax.f32 %v546, 0.0
    %v579 = vmax.f32 %v547, 0.0
    %v580 = vmax.f32 %v548, 0.0
    %v581 = vmax.f32 %v549, 0.0
    %v582 = vmax.f32 %v550, 0.0
    %v583 = vmax.f32 %v551, 0.0
    %v584 = vmax.f32 %v552, 0.0
    %v585 = vmax.f32 %v553, 0.0
    %v586 = vmax.f32 %v554, 0.0
    %v587 = vmax.f32 %v555, 0.0
    %v588 = vmax.f32 %v556, 0.0
    %v589 = vmax.f32 %v557, 0.0
    %v590 = vmax.f32 %v558, 0.0
    %v591 = vmax.f32 %v559, 0.0
    %v592 = vmax.f32 %v560, 0.0
    %v593 = vmax.f32 %v561, 0.0
    %v594 = vmax.f32 %v562, 0.0
    %v595 = vmax.f32 %v563, 0.0
    %v596 = vmax.f32 %v564, 0.0
    %v597 = vmax.f32 %v565, 0.0
    %v598 = vmax.f32 %v566, 0.0
    %v599 = vmax.f32 %v567, 0.0
    %v600 = vmax.f32 %v568, 0.0
    %v601 = vmax.f32 %v569, 0.0
    %v602 = vmax.f32 %v570, 0.0
    %v603 = vmax.f32 %v571, 0.0
    %v604 = vmax.f32 %v572, 0.0
    %v605 = vmax.f32 %v573, 0.0
    %v606 = vmax.f32 %v574, 0.0
    %v607 = vadd.f32 %v31, %v479
    %v608 = vadd.f32 %v32, %v480
    %v609 = vadd.f32 %v33, %v481
    %v610 = vadd.f32 %v34, %v482
    %v611 = vadd.f32 %v35, %v483
    %v612 = vadd.f32 %v36, %v484
    %v613 = vadd.f32 %v37, %v485
    %v614 = vadd.f32 %v38, %v486
    %v615 = vadd.f32 %v39, %v487
    %v616 = vadd.f32 %v40, %v488
    %v617 = vadd.f32 %v41, %v489
    %v618 = vadd.f32 %v42, %v490
    %v619 = vadd.f32 %v43, %v491
    %v620 = vadd.f32 %v44, %v492
    %v621 = vadd.f32 %v45, %v493
    %v622 = vadd.f32 %v46, %v494
    %v623 = vadd.f32 %v47, %v495
    %v624 = vadd.f32 %v48, %v496
    %v625 = vadd.f32 %v49, %v497
    %v626 = vadd.f32 %v50, %v498
    %v627 = vadd.f32 %v51, %v499
    %v628 = vadd.f32 %v52, %v500
    %v629 = vadd.f32 %v53, %v501
    %v630 = vadd.f32 %v54, %v502
    %v631 = vadd.f32 %v55, %v503
    %v632 = vadd.f32 %v56, %v504
    %v633 = vadd.f32 %v57, %v505
    %v634 = vadd.f32 %v58, %v506
    %v635 = vadd.f32 %v59, %v507
    %v636 = vadd.f32 %v60, %v508
    %v637 = vadd.f32 %v61, %v509
    %v638 = vadd.f32 %v62, %v510
    %v639 = vmul.f32 %v607, 0.5
    %v640 = vmul.f32 %v608, 0.5
    %v641 = vmul.f32 %v609, 0.5
    %v642 = vmul.f32 %v610, 0.5
    %v643 = vmul.f32 %v611, 0.5
    %v644 = vmul.f32 %v612, 0.5
    %v645 = vmul.f32 %v613, 0.5
    %v646 = vmul.f32 %v614, 0.5
    %v647 = vmul.f32 %v615, 0.5
    %v648 = vmul.f32 %v616, 0.5
    %v649 = vmul.f32 %v617, 0.5
    %v650 = vmul.f32 %v618, 0.5
    %v651 = vmul.f32 %v619, 0.5
    %v652 = vmul.f32 %v620, 0.5
    %v653 = vmul.f32 %v621, 0.5
    %v654 = vmul.f32 %v622, 0.5
    %v655 = vmul.f32 %v623, 0.5
    %v656 = vmul.f32 %v624, 0.5
    %v657 = vmul.f32 %v625, 0.5
    %v658 = vmul.f32 %v626, 0.5
    %v659 = vmul.f32 %v627, 0.5
    %v660 = vmul.f32 %v628, 0.5
    %v661 = vmul.f32 %v629, 0.5
    %v662 = vmul.f32 %v630, 0.5
    %v663 = vmul.f32 %v631, 0.5
    %v664 = vmul.f32 %v632, 0.5
    %v665 = vmul.f32 %v633, 0.5
    %v666 = vmul.f32 %v634, 0.5
    %v667 = vmul.f32 %v635, 0.5
    %v668 = vmul.f32 %v636, 0.5
    %v669 = vmul.f32 %v637, 0.5
    %v670 = vmul.f32 %v638, 0.5
    %vm671 = vcmp.eq.f32.partialorder %v31, 0.0
    %vm672 = vcmp.eq.f32.partialorder %v32, 0.0
    %vm673 = vcmp.eq.f32.partialorder %v33, 0.0
    %vm674 = vcmp.eq.f32.partialorder %v34, 0.0
    %vm675 = vcmp.eq.f32.partialorder %v35, 0.0
    %vm676 = vcmp.eq.f32.partialorder %v36, 0.0
    %vm677 = vcmp.eq.f32.partialorder %v37, 0.0
    %vm678 = vcmp.eq.f32.partialorder %v38, 0.0
    %vm679 = vcmp.eq.f32.partialorder %v39, 0.0
    %vm680 = vcmp.eq.f32.partialorder %v40, 0.0
    %vm681 = vcmp.eq.f32.partialorder %v41, 0.0
    %vm682 = vcmp.eq.f32.partialorder %v42, 0.0
    %vm683 = vcmp.eq.f32.partialorder %v43, 0.0
    %vm684 = vcmp.eq.f32.partialorder %v44, 0.0
    %vm685 = vcmp.eq.f32.partialorder %v45, 0.0
    %vm686 = vcmp.eq.f32.partialorder %v46, 0.0
    %vm687 = vcmp.eq.f32.partialorder %v47, 0.0
    %vm688 = vcmp.eq.f32.partialorder %v48, 0.0
    %vm689 = vcmp.eq.f32.partialorder %v49, 0.0
    %vm690 = vcmp.eq.f32.partialorder %v50, 0.0
    %vm691 = vcmp.eq.f32.partialorder %v51, 0.0
    %vm692 = vcmp.eq.f32.partialorder %v52, 0.0
    %vm693 = vcmp.eq.f32.partialorder %v53, 0.0
    %vm694 = vcmp.eq.f32.partialorder %v54, 0.0
    %vm695 = vcmp.eq.f32.partialorder %v55, 0.0
    %vm696 = vcmp.eq.f32.partialorder %v56, 0.0
    %vm697 = vcmp.eq.f32.partialorder %v57, 0.0
    %vm698 = vcmp.eq.f32.partialorder %v58, 0.0
    %vm699 = vcmp.eq.f32.partialorder %v59, 0.0
    %vm700 = vcmp.eq.f32.partialorder %v60, 0.0
    %vm701 = vcmp.eq.f32.partialorder %v61, 0.0
    %vm702 = vcmp.eq.f32.partialorder %v62, 0.0
    %v703 = vrot.slane %v31, 3
    %v704 = vrot.slane %v32, 3
    %v705 = vrot.slane %v33, 3
    %v706 = vrot.slane %v34, 3
    %v707 = vrot.slane %v35, 3
    %v708 = vrot.slane %v36, 3
    %v709 = vrot.slane %v37, 3
    %v710 = vrot.slane %v38, 3
    %v711 = vrot.slane %v39, 3
    %v712 = vrot.slane %v40, 3
    %v713 = vrot.slane %v41, 3
    %v714 = vrot.slane %v42, 3
    %v715 = vrot.slane %v43, 3
    %v716 = vrot.slane %v44, 3
    %v717 = vrot.slane %v45, 3
    %v718 = vrot.slane %v46, 3
    %v719 = vrot.slane %v47, 3
    %v720 = vrot.slane %v48, 3
    %v721 = vrot.slane %v49, 3
    %v722 = vrot.slane %v50, 3
    %v723 = vrot.slane %v51, 3
    %v724 = vrot.slane %v52, 3
    %v725 = vrot.slane %v53, 3
    %v726 = vrot.slane %v54, 3
    %v727 = vrot.slane %v55, 3
    %v728 = vrot.slane %v56, 3
    %v729 = vrot.slane %v57, 3
    %v730 = vrot.slane %v58, 3
    %v731 = vrot.slane %v59, 3
    %v732 = vrot.slane %v60, 3
    %v733 = vrot.slane %v61, 3
    %v734 = vrot.slane %v62, 3
    %v767 = vsub.f32 %v639, %v703
    %v768 = vsub.f32 %v640, %v704
    %v769 = vsub.f32 %v641, %v705
    %v770 = vsub.f32 %v642, %v706
    %v771 = vsub.f32 %v643, %v707
    %v772 = vsub.f32 %v644, %v708
    %v773 = vsub.f32 %v645, %v709
    %v774 = vsub.f32 %v646, %v710
    %v775 = vsub.f32 %v647, %v711
    %v776 = vsub.f32 %v648, %v712
    %v777 = vsub.f32 %v649, %v713
    %v778 = vsub.f32 %v650, %v714
    %v779 = vsub.f32 %v651, %v715
    %v780 = vsub.f32 %v652, %v716
    %v781 = vsub.f32 %v653, %v717
    %v782 = vsub.f32 %v654, %v718
    %v783 = vsub.f32 %v655, %v719
    %v784 = vsub.f32 %v656, %v720
    %v785 = vsub.f32 %v657, %v721
    %v786 = vsub.f32 %v658, %v722
    %v787 = vsub.f32 %v659, %v723
    %v788 = vsub.f32 %v660, %v724
    %v789 = vsub.f32 %v661, %v725
    %v790 = vsub.f32 %v662, %v726
    %v791 = vsub.f32 %v663, %v727
    %v792 = vsub.f32 %v664, %v728
    %v793 = vsub.f32 %v665, %v729
    %v794 = vsub.f32 %v666, %v730
    %v795 = vsub.f32 %v667, %v731
    %v796 = vsub.f32 %v668, %v732
    %v797 = vsub.f32 %v669, %v733
    %v798 = vsub.f32 %v670, %v734
    %v831 = vrot.slane %v639, 5
    %v832 = vrot.slane %v640, 5
    %v833 = vrot.slane %v641, 5
    %v834 = vrot.slane %v642, 5
    %v835 = vrot.slane %v643, 5
    %v836 = vrot.slane %v644, 5
    %v837 = vrot.slane %v645, 5
    %v838 = vrot.slane %v646, 5
    %v839 = vrot.slane %v647, 5
    %v840 = vrot.slane %v648, 5
    %v841 = vrot.slane %v649, 5
    %v842 = vrot.slane %v650, 5
    %v843 = vrot.slane %v651, 5
    %v844 = vrot.slane %v652, 5
    %v845 = vrot.slane %v653, 5
    %v846 = vrot.slane %v654, 5
    %v847 = vrot.slane %v655, 5
    %v848 = vrot.slane %v656, 5
    %v849 = vrot.slane %v657, 5
    %v850 = vrot.slane %v658, 5
    %v851 = vrot.slane %v659, 5
    %v852 = vrot.slane %v660, 5
    %v853 = vrot.slane %v661, 5
    %v854 = vrot.slane %v662, 5
    %v855 = vrot.slane %v663, 5
    %v856 = vrot.slane %v664, 5
    %v857 = vrot.slane %v665, 5
    %v858 = vrot.slane %v666, 5
    %v859 = vrot.slane %v667, 5
    %v860 = vrot.slane %v668, 5
    %v861 = vrot.slane %v669, 5
    %v862 = vrot.slane %v670, 5
    %v895 = vsub.f32 %v31, %v831
    %v896 = vsub.f32 %v32, %v832
    %v897 = vsub.f32 %v33, %v833
    %v898 = vsub.f32 %v34, %v834
    %v899 = vsub.f32 %v35, %v835
    %v900 = vsub.f32 %v36, %v836
    %v901 = vsub.f32 %v37, %v837
    %v902 = vsub.f32 %v38, %v838
    %v903 = vsub.f32 %v39, %v839
    %v904 = vsub.f32 %v40, %v840
    %v905 = vsub.f32 %v41, %v841
    %v906 = vsub.f32 %v42, %v842
    %v907 = vsub.f32 %v43, %v843
    %v908 = vsub.f32 %v44, %v844
    %v909 = vsub.f32 %v45, %v845
    %v910 = vsub.f32 %v46, %v846
    %v911 = vsub.f32 %v47, %v847
    %v912 = vsub.f32 %v48, %v848
    %v913 = vsub.f32 %v49, %v849
    %v914 = vsub.f32 %v50, %v850
    %v915 = vsub.f32 %v51, %v851
    %v916 = vsub.f32 %v52, %v852
    %v917 = vsub.f32 %v53, %v853
    %v918 = vsub.f32 %v54, %v854
    %v919 = vsub.f32 %v55, %v855
    %v920 = vsub.f32 %v56, %v856
    %v921 = vsub.f32 %v57, %v857
    %v922 = vsub.f32 %v58, %v858
    %v923 = vsub.f32 %v59, %v859
    %v924 = vsub.f32 %v60, %v860
    %v925 = vsub.f32 %v61, %v861
    %v926 = vsub.f32 %v62, %v862
    %v959 = vrot.slane %v767, 3
    %v960 = vrot.slane %v768, 3
    %v961 = vrot.slane %v769, 3
    %v962 = vrot.slane %v770, 3
    %v963 = vrot.slane %v771, 3
    %v964 = vrot.slane %v772, 3
    %v965 = vrot.slane %v773, 3
    %v966 = vrot.slane %v774, 3
    %v967 = vrot.slane %v775, 3
    %v968 = vrot.slane %v776, 3
    %v969 = vrot.slane %v777, 3
    %v970 = vrot.slane %v778, 3
    %v971 = vrot.slane %v779, 3
    %v972 = vrot.slane %v780, 3
    %v973 = vrot.slane %v781, 3
    %v974 = vrot.slane %v782, 3
    %v975 = vrot.slane %v783, 3
    %v976 = vrot.slane %v784, 3
    %v977 = vrot.slane %v785, 3
    %v978 = vrot.slane %v786, 3
    %v979 = vrot.slane %v787, 3
    %v980 = vrot.slane %v788, 3
    %v981 = vrot.slane %v789, 3
    %v982 = vrot.slane %v790, 3
    %v983 = vrot.slane %v791, 3
    %v984 = vrot.slane %v792, 3
    %v985 = vrot.slane %v793, 3
    %v986 = vrot.slane %v794, 3
    %v987 = vrot.slane %v795, 3
    %v988 = vrot.slane %v796, 3
    %v989 = vrot.slane %v797, 3
    %v990 = vrot.slane %v798, 3
    %v1055 = vrot.slane %v895, 6
    %v1056 = vrot.slane %v896, 6
    %v1057 = vrot.slane %v897, 6
    %v1058 = vrot.slane %v898, 6
    %v1059 = vrot.slane %v899, 6
    %v1060 = vrot.slane %v900, 6
    %v1061 = vrot.slane %v901, 6
    %v1062 = vrot.slane %v902, 6
    %v1063 = vrot.slane %v903, 6
    %v1064 = vrot.slane %v904, 6
    %v1065 = vrot.slane %v905, 6
    %v1066 = vrot.slane %v906, 6
    %v1067 = vrot.slane %v907, 6
    %v1068 = vrot.slane %v908, 6
    %v1069 = vrot.slane %v909, 6
    %v1070 = vrot.slane %v910, 6
    %v1071 = vrot.slane %v911, 6
    %v1072 = vrot.slane %v912, 6
    %v1073 = vrot.slane %v913, 6
    %v1074 = vrot.slane %v914, 6
    %v1075 = vrot.slane %v915, 6
    %v1076 = vrot.slane %v916, 6
    %v1077 = vrot.slane %v917, 6
    %v1078 = vrot.slane %v918, 6
    %v1079 = vrot.slane %v919, 6
    %v1080 = vrot.slane %v920, 6
    %v1081 = vrot.slane %v921, 6
    %v1082 = vrot.slane %v922, 6
    %v1083 = vrot.slane %v923, 6
    %v1084 = vrot.slane %v924, 6
    %v1085 = vrot.slane %v925, 6
    %v1086 = vrot.slane %v926, 6
    %v1119 = vsel %vm671, %v959, %v1055
    %v1120 = vsel %vm672, %v960, %v1056
    %v1121 = vsel %vm673, %v961, %v1057
    %v1122 = vsel %vm674, %v962, %v1058
    %v1123 = vsel %vm675, %v963, %v1059
    %v1124 = vsel %vm676, %v964, %v1060
    %v1125 = vsel %vm677, %v965, %v1061
    %v1126 = vsel %vm678, %v966, %v1062
    %v1127 = vsel %vm679, %v967, %v1063
    %v1128 = vsel %vm680, %v968, %v1064
    %v1129 = vsel %vm681, %v969, %v1065
    %v1130 = vsel %vm682, %v970, %v1066
    %v1131 = vsel %vm683, %v971, %v1067
    %v1132 = vsel %vm684, %v972, %v1068
    %v1133 = vsel %vm685, %v973, %v1069
    %v1134 = vsel %vm686, %v974, %v1070
    %v1135 = vsel %vm687, %v975, %v1071
    %v1136 = vsel %vm688, %v976, %v1072
    %v1137 = vsel %vm689, %v977, %v1073
    %v1138 = vsel %vm690, %v978, %v1074
    %v1139 = vsel %vm691, %v979, %v1075
    %v1140 = vsel %vm692, %v980, %v1076
    %v1141 = vsel %vm693, %v981, %v1077
    %v1142 = vsel %vm694, %v982, %v1078
    %v1143 = vsel %vm695, %v983, %v1079
    %v1144 = vsel %vm696, %v984, %v1080
    %v1145 = vsel %vm697, %v985, %v1081
    %v1146 = vsel %vm698, %v986, %v1082
    %v1147 = vsel %vm699, %v987, %v1083
    %v1148 = vsel %vm700, %v988, %v1084
    %v1149 = vsel %vm701, %v989, %v1085
    %v1150 = vsel %vm702, %v990, %v1086
    %vm1151 = vcmp.ne.f32.partialorder %v31, 0.0
    %vm1152 = vcmp.ne.f32.partialorder %v32, 0.0
    %vm1153 = vcmp.ne.f32.partialorder %v33, 0.0
    %vm1154 = vcmp.ne.f32.partialorder %v34, 0.0
    %vm1155 = vcmp.ne.f32.partialorder %v35, 0.0
    %vm1156 = vcmp.ne.f32.partialorder %v36, 0.0
    %vm1157 = vcmp.ne.f32.partialorder %v37, 0.0
    %vm1158 = vcmp.ne.f32.partialorder %v38, 0.0
    %vm1159 = vcmp.ne.f32.partialorder %v39, 0.0
    %vm1160 = vcmp.ne.f32.partialorder %v40, 0.0
    %vm1161 = vcmp.ne.f32.partialorder %v41, 0.0
    %vm1162 = vcmp.ne.f32.partialorder %v42, 0.0
    %vm1163 = vcmp.ne.f32.partialorder %v43, 0.0
    %vm1164 = vcmp.ne.f32.partialorder %v44, 0.0
    %vm1165 = vcmp.ne.f32.partialorder %v45, 0.0
    %vm1166 = vcmp.ne.f32.partialorder %v46, 0.0
    %vm1167 = vcmp.ne.f32.partialorder %v47, 0.0
    %vm1168 = vcmp.ne.f32.partialorder %v48, 0.0
    %vm1169 = vcmp.ne.f32.partialorder %v49, 0.0
    %vm1170 = vcmp.ne.f32.partialorder %v50, 0.0
    %vm1171 = vcmp.ne.f32.partialorder %v51, 0.0
    %vm1172 = vcmp.ne.f32.partialorder %v52, 0.0
    %vm1173 = vcmp.ne.f32.partialorder %v53, 0.0
    %vm1174 = vcmp.ne.f32.partialorder %v54, 0.0
    %vm1175 = vcmp.ne.f32.partialorder %v55, 0.0
    %vm1176 = vcmp.ne.f32.partialorder %v56, 0.0
    %vm1177 = vcmp.ne.f32.partialorder %v57, 0.0
    %vm1178 = vcmp.ne.f32.partialorder %v58, 0.0
    %vm1179 = vcmp.ne.f32.partialorder %v59, 0.0
    %vm1180 = vcmp.ne.f32.partialorder %v60, 0.0
    %vm1181 = vcmp.ne.f32.partialorder %v61, 0.0
    %vm1182 = vcmp.ne.f32.partialorder %v62, 0.0
    %v1183 = vmax.f32 %v1119, 0.0
    %v1184 = vmax.f32 %v1120, 0.0
    %v1185 = vmax.f32 %v1121, 0.0
    %v1186 = vmax.f32 %v1122, 0.0
    %v1187 = vmax.f32 %v1123, 0.0
    %v1188 = vmax.f32 %v1124, 0.0
    %v1189 = vmax.f32 %v1125, 0.0
    %v1190 = vmax.f32 %v1126, 0.0
    %v1191 = vmax.f32 %v1127, 0.0
    %v1192 = vmax.f32 %v1128, 0.0
    %v1193 = vmax.f32 %v1129, 0.0
    %v1194 = vmax.f32 %v1130, 0.0
    %v1195 = vmax.f32 %v1131, 0.0
    %v1196 = vmax.f32 %v1132, 0.0
    %v1197 = vmax.f32 %v1133, 0.0
    %v1198 = vmax.f32 %v1134, 0.0
    %v1199 = vmax.f32 %v1135, 0.0
    %v1200 = vmax.f32 %v1136, 0.0
    %v1201 = vmax.f32 %v1137, 0.0
    %v1202 = vmax.f32 %v1138, 0.0
    %v1203 = vmax.f32 %v1139, 0.0
    %v1204 = vmax.f32 %v1140, 0.0
    %v1205 = vmax.f32 %v1141, 0.0
    %v1206 = vmax.f32 %v1142, 0.0
    %v1207 = vmax.f32 %v1143, 0.0
    %v1208 = vmax.f32 %v1144, 0.0
    %v1209 = vmax.f32 %v1145, 0.0
    %v1210 = vmax.f32 %v1146, 0.0
    %v1211 = vmax.f32 %v1147, 0.0
    %v1212 = vmax.f32 %v1148, 0.0
    %v1213 = vmax.f32 %v1149, 0.0
    %v1214 = vmax.f32 %v1150, 0.0
    %v1247 = vrot.slane %v1183, 1
    %v1248 = vrot.slane %v1184, 1
    %v1249 = vrot.slane %v1185, 1
    %v1250 = vrot.slane %v1186, 1
    %v1251 = vrot.slane %v1187, 1
    %v1252 = vrot.slane %v1188, 1
    %v1253 = vrot.slane %v1189, 1
    %v1254 = vrot.slane %v1190, 1
    %v1255 = vrot.slane %v1191, 1
    %v1256 = vrot.slane %v1192, 1
    %v1257 = vrot.slane %v1193, 1
    %v1258 = vrot.slane %v1194, 1
    %v1259 = vrot.slane %v1195, 1
    %v1260 = vrot.slane %v1196, 1
    %v1261 = vrot.slane %v1197, 1
    %v1262 = vrot.slane %v1198, 1
    %v1263 = vrot.slane %v1199, 1
    %v1264 = vrot.slane %v1200, 1
    %v1265 = vrot.slane %v1201, 1
    %v1266 = vrot.slane %v1202, 1
    %v1267 = vrot.slane %v1203, 1
    %v1268 = vrot.slane %v1204, 1
    %v1269 = vrot.slane %v1205, 1
    %v1270 = vrot.slane %v1206, 1
    %v1271 = vrot.slane %v1207, 1
    %v1272 = vrot.slane %v1208, 1
    %v1273 = vrot.slane %v1209, 1
    %v1274 = vrot.slane %v1210, 1
    %v1275 = vrot.slane %v1211, 1
    %v1276 = vrot.slane %v1212, 1
    %v1277 = vrot.slane %v1213, 1
    %v1278 = vrot.slane %v1214, 1
    %v1311 = vsel %vm1151, %v1247, 0.0
    %v1312 = vsel %vm1152, %v1248, 0.0
    %v1313 = vsel %vm1153, %v1249, 0.0
    %v1314 = vsel %vm1154, %v1250, 0.0
    %v1315 = vsel %vm1155, %v1251, 0.0
    %v1316 = vsel %vm1156, %v1252, 0.0
    %v1317 = vsel %vm1157, %v1253, 0.0
    %v1318 = vsel %vm1158, %v1254, 0.0
    %v1319 = vsel %vm1159, %v1255, 0.0
    %v1320 = vsel %vm1160, %v1256, 0.0
    %v1321 = vsel %vm1161, %v1257, 0.0
    %v1322 = vsel %vm1162, %v1258, 0.0
    %v1323 = vsel %vm1163, %v1259, 0.0
    %v1324 = vsel %vm1164, %v1260, 0.0
    %v1325 = vsel %vm1165, %v1261, 0.0
    %v1326 = vsel %vm1166, %v1262, 0.0
    %v1327 = vsel %vm1167, %v1263, 0.0
    %v1328 = vsel %vm1168, %v1264, 0.0
    %v1329 = vsel %vm1169, %v1265, 0.0
    %v1330 = vsel %vm1170, %v1266, 0.0
    %v1331 = vsel %vm1171, %v1267, 0.0
    %v1332 = vsel %vm1172, %v1268, 0.0
    %v1333 = vsel %vm1173, %v1269, 0.0
    %v1334 = vsel %vm1174, %v1270, 0.0
    %v1335 = vsel %vm1175, %v1271, 0.0
    %v1336 = vsel %vm1176, %v1272, 0.0
    %v1337 = vsel %vm1177, %v1273, 0.0
    %v1338 = vsel %vm1178, %v1274, 0.0
    %v1339 = vsel %vm1179, %v1275, 0.0
    %v1340 = vsel %vm1180, %v1276, 0.0
    %v1341 = vsel %vm1181, %v1277, 0.0
    %v1342 = vsel %vm1182, %v1278, 0.0
    %v1343 = vld [vmem:[#allocation2] sm:$0xff]
    %v1344 = vld [vmem:[#allocation2 + $0x8] sm:$0xff]
    %v1345 = vld [vmem:[#allocation2 + $0x10] sm:$0xff]
    %v1346 = vld [vmem:[#allocation2 + $0x18] sm:$0xff]
    %v1347 = vmul.f32 %v447, 0.1
    %v1348 = vmul.f32 %v448, 0.1
    %v1349 = vmul.f32 %v449, 0.1
    %v1350 = vmul.f32 %v450, 0.1
    %v1351 = vmul.f32 %v451, 0.1
    %v1352 = vmul.f32 %v452, 0.1
    %v1353 = vmul.f32 %v453, 0.1
    %v1354 = vmul.f32 %v454, 0.1
    %v1355 = vmul.f32 %v455, 0.1
    %v1356 = vmul.f32 %v456, 0.1
    %v1357 = vmul.f32 %v457, 0.1
    %v1358 = vmul.f32 %v458, 0.1
    %v1359 = vmul.f32 %v459, 0.1
    %v1360 = vmul.f32 %v460, 0.1
    %v1361 = vmul.f32 %v461, 0.1
    %v1362 = vmul.f32 %v462, 0.1
    %v1363 = vmul.f32 %v463, 0.1
    %v1364 = vmul.f32 %v464, 0.1
    %v1365 = vmul.f32 %v465, 0.1
    %v1366 = vmul.f32 %v466, 0.1
    %v1367 = vmul.f32 %v467, 0.1
    %v1368 = vmul.f32 %v468, 0.1
    %v1369 = vmul.f32 %v469, 0.1
    %v1370 = vmul.f32 %v470, 0.1
    %v1371 = vmul.f32 %v471, 0.1
    %v1372 = vmul.f32 %v472, 0.1
    %v1373 = vmul.f32 %v473, 0.1
    %v1374 = vmul.f32 %v474, 0.1
    %v1375 = vmul.f32 %v475, 0.1
    %v1376 = vmul.f32 %v476, 0.1
    %v1377 = vmul.f32 %v477, 0.1
    %v1378 = vmul.f32 %v478, 0.1
    %v1379 = vmul.f32 %v575, 10.0
    %v1380 = vmul.f32 %v576, 10.0
    %v1381 = vmul.f32 %v577, 10.0
    %v1382 = vmul.f32 %v578, 10.0
    %v1383 = vmul.f32 %v579, 10.0
    %v1384 = vmul.f32 %v580, 10.0
    %v1385 = vmul.f32 %v581, 10.0
    %v1386 = vmul.f32 %v582, 10.0
    %v1387 = vmul.f32 %v583, 10.0
    %v1388 = vmul.f32 %v584, 10.0
    %v1389 = vmul.f32 %v585, 10.0
    %v1390 = vmul.f32 %v586, 10.0
    %v1391 = vmul.f32 %v587, 10.0
    %v1392 = vmul.f32 %v588, 10.0
    %v1393 = vmul.f32 %v589, 10.0
    %v1394 = vmul.f32 %v590, 10.0
    %v1395 = vmul.f32 %v591, 10.0
    %v1396 = vmul.f32 %v592, 10.0
    %v1397 = vmul.f32 %v593, 10.0
    %v1398 = vmul.f32 %v594, 10.0
    %v1399 = vmul.f32 %v595, 10.0
    %v1400 = vmul.f32 %v596, 10.0
    %v1401 = vmul.f32 %v597, 10.0
    %v1402 = vmul.f32 %v598, 10.0
    %v1403 = vmul.f32 %v599, 10.0
    %v1404 = vmul.f32 %v600, 10.0
    %v1405 = vmul.f32 %v601, 10.0
    %v1406 = vmul.f32 %v602, 10.0
    %v1407 = vmul.f32 %v603, 10.0
    %v1408 = vmul.f32 %v604, 10.0
    %v1409 = vmul.f32 %v605, 10.0
    %v1410 = vmul.f32 %v606, 10.0
    %v1443 = vrot.slane %v1379, 6
    %v1444 = vrot.slane %v1380, 6
    %v1445 = vrot.slane %v1381, 6
    %v1446 = vrot.slane %v1382, 6
    %v1447 = vrot.slane %v1383, 6
    %v1448 = vrot.slane %v1384, 6
    %v1449 = vrot.slane %v1385, 6
    %v1450 = vrot.slane %v1386, 6
    %v1451 = vrot.slane %v1387, 6
    %v1452 = vrot.slane %v1388, 6
    %v1453 = vrot.slane %v1389, 6
    %v1454 = vrot.slane %v1390, 6
    %v1455 = vrot.slane %v1391, 6
    %v1456 = vrot.slane %v1392, 6
    %v1457 = vrot.slane %v1393, 6
    %v1458 = vrot.slane %v1394, 6
    %v1459 = vrot.slane %v1395, 6
    %v1460 = vrot.slane %v1396, 6
    %v1461 = vrot.slane %v1397, 6
    %v1462 = vrot.slane %v1398, 6
    %v1463 = vrot.slane %v1399, 6
    %v1464 = vrot.slane %v1400, 6
    %v1465 = vrot.slane %v1401, 6
    %v1466 = vrot.slane %v1402, 6
    %v1467 = vrot.slane %v1403, 6
    %v1468 = vrot.slane %v1404, 6
    %v1469 = vrot.slane %v1405, 6
    %v1470 = vrot.slane %v1406, 6
    %v1471 = vrot.slane %v1407, 6
    %v1472 = vrot.slane %v1408, 6
    %v1473 = vrot.slane %v1409, 6
    %v1474 = vrot.slane %v1410, 6
    %v1507 = vadd.f32 %v1347, %v1443
    %v1508 = vadd.f32 %v1348, %v1444
    %v1509 = vadd.f32 %v1349, %v1445
    %v1510 = vadd.f32 %v1350, %v1446
    %v1511 = vadd.f32 %v1351, %v1447
    %v1512 = vadd.f32 %v1352, %v1448
    %v1513 = vadd.f32 %v1353, %v1449
    %v1514 = vadd.f32 %v1354, %v1450
    %v1515 = vadd.f32 %v1355, %v1451
    %v1516 = vadd.f32 %v1356, %v1452
    %v1517 = vadd.f32 %v1357, %v1453
    %v1518 = vadd.f32 %v1358, %v1454
    %v1519 = vadd.f32 %v1359, %v1455
    %v1520 = vadd.f32 %v1360, %v1456
    %v1521 = vadd.f32 %v1361, %v1457
    %v1522 = vadd.f32 %v1362, %v1458
    %v1523 = vadd.f32 %v1363, %v1459
    %v1524 = vadd.f32 %v1364, %v1460
    %v1525 = vadd.f32 %v1365, %v1461
    %v1526 = vadd.f32 %v1366, %v1462
    %v1527 = vadd.f32 %v1367, %v1463
    %v1528 = vadd.f32 %v1368, %v1464
    %v1529 = vadd.f32 %v1369, %v1465
    %v1530 = vadd.f32 %v1370, %v1466
    %v1531 = vadd.f32 %v1371, %v1467
    %v1532 = vadd.f32 %v1372, %v1468
    %v1533 = vadd.f32 %v1373, %v1469
    %v1534 = vadd.f32 %v1374, %v1470
    %v1535 = vadd.f32 %v1375, %v1471
    %v1536 = vadd.f32 %v1376, %v1472
    %v1537 = vadd.f32 %v1377, %v1473
    %v1538 = vadd.f32 %v1378, %v1474
    %v1539 = vmul.f32 %v1311, 0.5
    %v1540 = vmul.f32 %v1312, 0.5
    %v1541 = vmul.f32 %v1313, 0.5
    %v1542 = vmul.f32 %v1314, 0.5
    %v1543 = vmul.f32 %v1315, 0.5
    %v1544 = vmul.f32 %v1316, 0.5
    %v1545 = vmul.f32 %v1317, 0.5
    %v1546 = vmul.f32 %v1318, 0.5
    %v1547 = vmul.f32 %v1319, 0.5
    %v1548 = vmul.f32 %v1320, 0.5
    %v1549 = vmul.f32 %v1321, 0.5
    %v1550 = vmul.f32 %v1322, 0.5
    %v1551 = vmul.f32 %v1323, 0.5
    %v1552 = vmul.f32 %v1324, 0.5
    %v1553 = vmul.f32 %v1325, 0.5
    %v1554 = vmul.f32 %v1326, 0.5
    %v1555 = vmul.f32 %v1327, 0.5
    %v1556 = vmul.f32 %v1328, 0.5
    %v1557 = vmul.f32 %v1329, 0.5
    %v1558 = vmul.f32 %v1330, 0.5
    %v1559 = vmul.f32 %v1331, 0.5
    %v1560 = vmul.f32 %v1332, 0.5
    %v1561 = vmul.f32 %v1333, 0.5
    %v1562 = vmul.f32 %v1334, 0.5
    %v1563 = vmul.f32 %v1335, 0.5
    %v1564 = vmul.f32 %v1336, 0.5
    %v1565 = vmul.f32 %v1337, 0.5
    %v1566 = vmul.f32 %v1338, 0.5
    %v1567 = vmul.f32 %v1339, 0.5
    %v1568 = vmul.f32 %v1340, 0.5
    %v1569 = vmul.f32 %v1341, 0.5
    %v1570 = vmul.f32 %v1342, 0.5
    %v1603 = vrot.slane %v1539, 2
    %v1604 = vrot.slane %v1540, 2
    %v1605 = vrot.slane %v1541, 2
    %v1606 = vrot.slane %v1542, 2
    %v1607 = vrot.slane %v1543, 2
    %v1608 = vrot.slane %v1544, 2
    %v1609 = vrot.slane %v1545, 2
    %v1610 = vrot.slane %v1546, 2
    %v1611 = vrot.slane %v1547, 2
    %v1612 = vrot.slane %v1548, 2
    %v1613 = vrot.slane %v1549, 2
    %v1614 = vrot.slane %v1550, 2
    %v1615 = vrot.slane %v1551, 2
    %v1616 = vrot.slane %v1552, 2
    %v1617 = vrot.slane %v1553, 2
    %v1618 = vrot.slane %v1554, 2
    %v1619 = vrot.slane %v1555, 2
    %v1620 = vrot.slane %v1556, 2
    %v1621 = vrot.slane %v1557, 2
    %v1622 = vrot.slane %v1558, 2
    %v1623 = vrot.slane %v1559, 2
    %v1624 = vrot.slane %v1560, 2
    %v1625 = vrot.slane %v1561, 2
    %v1626 = vrot.slane %v1562, 2
    %v1627 = vrot.slane %v1563, 2
    %v1628 = vrot.slane %v1564, 2
    %v1629 = vrot.slane %v1565, 2
    %v1630 = vrot.slane %v1566, 2
    %v1631 = vrot.slane %v1567, 2
    %v1632 = vrot.slane %v1568, 2
    %v1633 = vrot.slane %v1569, 2
    %v1634 = vrot.slane %v1570, 2
    %v1667 = vadd.f32 %v1507, %v1603
    %v1668 = vadd.f32 %v1508, %v1604
    %v1669 = vadd.f32 %v1509, %v1605
    %v1670 = vadd.f32 %v1510, %v1606
    %v1671 = vadd.f32 %v1511, %v1607
    %v1672 = vadd.f32 %v1512, %v1608
    %v1673 = vadd.f32 %v1513, %v1609
    %v1674 = vadd.f32 %v1514, %v1610
    %v1675 = vadd.f32 %v1515, %v1611
    %v1676 = vadd.f32 %v1516, %v1612
    %v1677 = vadd.f32 %v1517, %v1613
    %v1678 = vadd.f32 %v1518, %v1614
    %v1679 = vadd.f32 %v1519, %v1615
    %v1680 = vadd.f32 %v1520, %v1616
    %v1681 = vadd.f32 %v1521, %v1617
    %v1682 = vadd.f32 %v1522, %v1618
    %v1683 = vadd.f32 %v1523, %v1619
    %v1684 = vadd.f32 %v1524, %v1620
    %v1685 = vadd.f32 %v1525, %v1621
    %v1686 = vadd.f32 %v1526, %v1622
    %v1687 = vadd.f32 %v1527, %v1623
    %v1688 = vadd.f32 %v1528, %v1624
    %v1689 = vadd.f32 %v1529, %v1625
    %v1690 = vadd.f32 %v1530, %v1626
    %v1691 = vadd.f32 %v1531, %v1627
    %v1692 = vadd.f32 %v1532, %v1628
    %v1693 = vadd.f32 %v1533, %v1629
    %v1694 = vadd.f32 %v1534, %v1630
    %v1695 = vadd.f32 %v1535, %v1631
    %v1696 = vadd.f32 %v1536, %v1632
    %v1697 = vadd.f32 %v1537, %v1633
    %v1698 = vadd.f32 %v1538, %v1634
    %1731 = vst [vmem:[#allocation1] sm:$0xff] %v1667
    %1732 = vst [vmem:[#allocation1 + $0x9] sm:$0xff] %v1668
    %1733 = vst [vmem:[#allocation1 + $0x12] sm:$0xff] %v1669
    %1734 = vst [vmem:[#allocation1 + $0x1b] sm:$0xff] %v1670
    %1735 = vst [vmem:[#allocation1 + $0x24] sm:$0xff] %v1671
    %1736 = vst [vmem:[#allocation1 + $0x2d] sm:$0xff] %v1672
    %1737 = vst [vmem:[#allocation1 + $0x36] sm:$0xff] %v1673
    %1738 = vst [vmem:[#allocation1 + $0x3f] sm:$0xff] %v1674
    %s1739 = scalar_lea.vmem [#allocation1], 2
    %v1740 = vld [vmem:[%s1739] ss:$9 sm:$0xff]
    %1741 = vst [vmem:[#allocation1] sm:$0xff] %v1675
    %1742 = vst [vmem:[#allocation1 + $0x9] sm:$0xff] %v1676
    %1743 = vst [vmem:[#allocation1 + $0x12] sm:$0xff] %v1677
    %1744 = vst [vmem:[#allocation1 + $0x1b] sm:$0xff] %v1678
    %1745 = vst [vmem:[#allocation1 + $0x24] sm:$0xff] %v1679
    %1746 = vst [vmem:[#allocation1 + $0x2d] sm:$0xff] %v1680
    %1747 = vst [vmem:[#allocation1 + $0x36] sm:$0xff] %v1681
    %1748 = vst [vmem:[#allocation1 + $0x3f] sm:$0xff] %v1682
    %v1749 = vld [vmem:[%s1739] ss:$9 sm:$0xff]
    %1750 = vst [vmem:[#allocation1] sm:$0xff] %v1683
    %1751 = vst [vmem:[#allocation1 + $0x9] sm:$0xff] %v1684
    %1752 = vst [vmem:[#allocation1 + $0x12] sm:$0xff] %v1685
    %1753 = vst [vmem:[#allocation1 + $0x1b] sm:$0xff] %v1686
    %1754 = vst [vmem:[#allocation1 + $0x24] sm:$0xff] %v1687
    %1755 = vst [vmem:[#allocation1 + $0x2d] sm:$0xff] %v1688
    %1756 = vst [vmem:[#allocation1 + $0x36] sm:$0xff] %v1689
    %1757 = vst [vmem:[#allocation1 + $0x3f] sm:$0xff] %v1690
    %v1758 = vld [vmem:[%s1739] ss:$9 sm:$0xff]
    %1759 = vst [vmem:[#allocation1] sm:$0xff] %v1691
    %1760 = vst [vmem:[#allocation1 + $0x9] sm:$0xff] %v1692
    %1761 = vst [vmem:[#allocation1 + $0x12] sm:$0xff] %v1693
    %1762 = vst [vmem:[#allocation1 + $0x1b] sm:$0xff] %v1694
    %1763 = vst [vmem:[#allocation1 + $0x24] sm:$0xff] %v1695
    %1764 = vst [vmem:[#allocation1 + $0x2d] sm:$0xff] %v1696
    %1765 = vst [vmem:[#allocation1 + $0x36] sm:$0xff] %v1697
    %1766 = vst [vmem:[#allocation1 + $0x3f] sm:$0xff] %v1698
    %v1767 = vld [vmem:[%s1739] ss:$9 sm:$0xff]
    %v1772 = vadd.f32 %v1343, %v1740
    %v1773 = vadd.f32 %v1344, %v1749
    %v1774 = vadd.f32 %v1345, %v1758
    %v1775 = vadd.f32 %v1346, %v1767
    %1776 = vst [vmem:[#allocation2] sm:$0xff] %v1772
    %1777 = vst [vmem:[#allocation2 + $0x8] sm:$0xff] %v1773
    %1778 = vst [vmem:[#allocation2 + $0x10] sm:$0xff] %v1774
    %1779 = vst [vmem:[#allocation2 + $0x18] sm:$0xff] %v1775
    // Predicated region
    $region14: #{tpu_custom_call.1} parent=1 // pred_check
      %p1780 = pneg %p23
    $region15: #{tpu_custom_call.1} parent=1 // pred_check_branch
      %1782 = sbr.rel (%p1780) target = $region17
    $region16: #{tpu_custom_call.1} parent=1 // pred_region
      %v1783 = vld [vmem:[#allocation2] sm:$0xff]
      %v1784 = vld [vmem:[#allocation2 + $0x8] sm:$0xff]
      %v1785 = vld [vmem:[#allocation2 + $0x10] sm:$0xff]
      %v1786 = vld [vmem:[#allocation2 + $0x18] sm:$0xff]
      %v1791 = vperm.slane %v1783, 0
      %v1792 = vperm.slane %v1783, 1
      %v1793 = vperm.slane %v1783, 2
      %v1794 = vperm.slane %v1783, 3
      %v1795 = vperm.slane %v1783, 4
      %v1796 = vperm.slane %v1783, 5
      %v1797 = vperm.slane %v1783, 6
      %v1798 = vperm.slane %v1783, 7
      %v1799 = vperm.slane %v1784, 0
      %v1800 = vperm.slane %v1784, 1
      %v1801 = vperm.slane %v1784, 2
      %v1802 = vperm.slane %v1784, 3
      %v1803 = vperm.slane %v1784, 4
      %v1804 = vperm.slane %v1784, 5
      %v1805 = vperm.slane %v1784, 6
      %v1806 = vperm.slane %v1784, 7
      %v1807 = vperm.slane %v1785, 0
      %v1808 = vperm.slane %v1785, 1
      %v1809 = vperm.slane %v1785, 2
      %v1810 = vperm.slane %v1785, 3
      %v1811 = vperm.slane %v1785, 4
      %v1812 = vperm.slane %v1785, 5
      %v1813 = vperm.slane %v1785, 6
      %v1814 = vperm.slane %v1785, 7
      %v1815 = vperm.slane %v1786, 0
      %v1816 = vperm.slane %v1786, 1
      %v1817 = vperm.slane %v1786, 2
      %v1818 = vperm.slane %v1786, 3
      %v1819 = vperm.slane %v1786, 4
      %v1820 = vperm.slane %v1786, 5
      %v1821 = vperm.slane %v1786, 6
      %v1822 = vperm.slane %v1786, 7
      %vm1855 = vcmask 1040384
      %v1856 = vsel %vm1855, %v1791, 0.0
      %v1857 = vsel %vm1855, %v1792, 0.0
      %v1858 = vadd.f32 %v1856, %v1857
      %v1859 = vsel %vm1855, %v1793, 0.0
      %v1860 = vadd.f32 %v1858, %v1859
      %v1861 = vsel %vm1855, %v1794, 0.0
      %v1862 = vadd.f32 %v1860, %v1861
      %v1863 = vsel %vm1855, %v1795, 0.0
      %v1864 = vadd.f32 %v1862, %v1863
      %v1865 = vsel %vm1855, %v1796, 0.0
      %v1866 = vadd.f32 %v1864, %v1865
      %v1867 = vsel %vm1855, %v1797, 0.0
      %v1868 = vadd.f32 %v1866, %v1867
      %v1869 = vsel %vm1855, %v1798, 0.0
      %v1870 = vadd.f32 %v1868, %v1869
      %v1871 = vsel %vm1855, %v1799, 0.0
      %v1872 = vadd.f32 %v1870, %v1871
      %v1873 = vsel %vm1855, %v1800, 0.0
      %v1874 = vadd.f32 %v1872, %v1873
      %v1875 = vsel %vm1855, %v1801, 0.0
      %v1876 = vadd.f32 %v1874, %v1875
      %v1877 = vsel %vm1855, %v1802, 0.0
      %v1878 = vadd.f32 %v1876, %v1877
      %v1879 = vsel %vm1855, %v1803, 0.0
      %v1880 = vadd.f32 %v1878, %v1879
      %v1881 = vsel %vm1855, %v1804, 0.0
      %v1882 = vadd.f32 %v1880, %v1881
      %v1883 = vsel %vm1855, %v1805, 0.0
      %v1884 = vadd.f32 %v1882, %v1883
      %v1885 = vsel %vm1855, %v1806, 0.0
      %v1886 = vadd.f32 %v1884, %v1885
      %v1887 = vsel %vm1855, %v1807, 0.0
      %v1888 = vadd.f32 %v1886, %v1887
      %v1889 = vsel %vm1855, %v1808, 0.0
      %v1890 = vadd.f32 %v1888, %v1889
      %v1891 = vsel %vm1855, %v1809, 0.0
      %v1892 = vadd.f32 %v1890, %v1891
      %v1893 = vsel %vm1855, %v1810, 0.0
      %v1894 = vadd.f32 %v1892, %v1893
      %v1895 = vsel %vm1855, %v1811, 0.0
      %v1896 = vadd.f32 %v1894, %v1895
      %v1897 = vsel %vm1855, %v1812, 0.0
      %v1898 = vadd.f32 %v1896, %v1897
      %v1899 = vsel %vm1855, %v1813, 0.0
      %v1900 = vadd.f32 %v1898, %v1899
      %v1901 = vsel %vm1855, %v1814, 0.0
      %v1902 = vadd.f32 %v1900, %v1901
      %v1903 = vsel %vm1855, %v1815, 0.0
      %v1904 = vadd.f32 %v1902, %v1903
      %v1905 = vsel %vm1855, %v1816, 0.0
      %v1906 = vadd.f32 %v1904, %v1905
      %v1907 = vsel %vm1855, %v1817, 0.0
      %v1908 = vadd.f32 %v1906, %v1907
      %v1909 = vsel %vm1855, %v1818, 0.0
      %v1910 = vadd.f32 %v1908, %v1909
      %v1911 = vsel %vm1855, %v1819, 0.0
      %v1912 = vadd.f32 %v1910, %v1911
      %v1913 = vsel %vm1855, %v1820, 0.0
      %v1914 = vadd.f32 %v1912, %v1913
      %v1915 = vsel %vm1855, %v1821, 0.0
      %v1916 = vadd.f32 %v1914, %v1915
      %v1917 = vsel %vm1855, %v1822, 0.0
      %v1918 = vadd.f32 %v1916, %v1917
      %1919 = vadd.xlane.f32.xlu0 %v1918
      %v1920 = vpop.xlane.xlu0 %1919
      %v1921 = vrot.slane %v1920, 4
      %v1922 = vadd.f32 %v1920, %v1921
      %v1923 = vrot.slane %v1922, 2
      %v1924 = vadd.f32 %v1922, %v1923
      %v1925 = vrot.slane %v1924, 1
      %v1926 = vadd.f32 %v1924, %v1925
      %s1927 = vtos %v1926
      %s1928 = smul.f32 %s1927, 0.125
      %s1929 = scalar_lea.smem [#allocation6], 0
      %1930 = sst [smem:[%s1929]] %s1928
    $region17: #{tpu_custom_call.1} parent=1 // pred_fallthru
      _
    // Predicated region
    $region18: #{tpu_custom_call.1} parent=1 // pred_check
      _
    $region19: #{tpu_custom_call.1} parent=1 // pred_check_branch
      %1932 = sbr.rel (0) target = $region21
    $region20: #{tpu_custom_call.1} parent=1 // pred_region
      %1934 = vsyncadd [#allocation5], 0
      %s1936 = sshll.u32 %s1, 4
      %s1937 = int_to_ptr.hbm [resolvable:$true] %s1936
      %1939 = dma.smem_to_hbm [#allocation6], 16, %s1937, [#allocation5]
    $region21: #{tpu_custom_call.1} parent=1 // pred_fallthru
      _
    // Predicated region
    $region22: #{tpu_custom_call.1} parent=1 // pred_check
      _
    $region23: #{tpu_custom_call.1} parent=1 // pred_check_branch
      %1941 = sbr.rel (0) target = $region25
    $region24: #{tpu_custom_call.1} parent=1 // pred_region
      %1943 = dma.done [#allocation5], 16
    $region25: #{tpu_custom_call.1} parent=1 // pred_fallthru
      _
    %1944 = sfence
    %1945 = vsyncpa [#allocation4], 1
    %1946 = vsyncpa [#allocation5], 1

</llo_original>
